<compile_context>
chip_gen: v7x
topology: tpu7x:2x2x1
jax: 0.10.0
libtpu: 0.0.40
codegen_flags: <defaults>
</compile_context>

<pallas_src>
import jax
import jax.numpy as jnp
from jax.experimental import pallas as pl
from jax.experimental.pallas import tpu as pltpu

EPS = 1e-5

# f32 keeps exact numerical parity with the PyTorch module.  On v6e/v7x flip to
# jnp.bfloat16 to halve the dominant HBM read of x (accumulation stays f32 via
# preferred_element_type); keep f32 on v5e (no bf16 VPU) and relax the allclose
# tolerances in __main__ if you do.
COMPUTE_DTYPE = jnp.float32

# Packed rows per grid step.  1024 packed rows == 8192 original rows: a few MB
# double-buffered, far under every generation's scoped-VMEM limit, and large
# enough to amortize per-step overhead.
MAX_TILE_PACKED = 1024


def _mlp_kernel(x_ref, w1_ref, b1_ref, w2_ref, b2_ref, w3_ref, b3_ref, o_ref):
    """(tile, P*in) @ blockdiag(W1') -> ReLU -> @ blockdiag(W2) -> ReLU -> @ blockdiag(W3)."""
    x = x_ref[...]
    h = jnp.dot(x, w1_ref[...], preferred_element_type=jnp.float32) + b1_ref[...]
    h = jnp.maximum(h, 0.0)
    h = jnp.dot(h.astype(w2_ref.dtype), w2_ref[...],
                preferred_element_type=jnp.float32) + b2_ref[...]
    h = jnp.maximum(h, 0.0)
    out = jnp.dot(h.astype(w3_ref.dtype), w3_ref[...],
                  preferred_element_type=jnp.float32) + b3_ref[...]
    o_ref[...] = out.astype(o_ref.dtype)


def _round_up(x, m):
    return ((x + m - 1) // m) * m


def _block_diag(w, k):
    """k copies of w (a, b) on the diagonal -> (k*a, k*b)."""
    if k == 1:
        return w
    return jnp.kron(jnp.eye(k, dtype=w.dtype), w)


@jax.jit
def simple_model_forward(x, params):
    """x: (N, input_size) or (B, S, input_size). params: dict of (in,out) weights."""
    orig_shape = x.shape
    x2 = x.reshape((-1, x.shape[-1])) if x.ndim == 3 else x
    n, in_f = x2.shape
    h1 = params["w1"].shape[1]
    h2 = params["w2"].shape[1]
    out_f = params["w3"].shape[1]

    # ---- BatchNorm1d(affine=False), training-mode batch stats, folded into fc1.
    # Single pass over x (var = E[x^2] - mean^2, clamped >= 0) so x is read from
    # HBM once here and once by the kernel.
    # TODO(synk): eval-mode running_mean/running_var tracking is not modeled;
    # training-mode batch statistics are used (same as calling the torch module).
    x32 = x2.astype(jnp.float32)
    mean = jnp.mean(x32, axis=0, keepdims=True)                      # (1, in_f)
    mean_sq = jnp.mean(x32 * x32, axis=0, keepdims=True)             # (1, in_f)
    var = jnp.maximum(mean_sq - mean * mean, 0.0)                    # biased
    s = jax.lax.rsqrt(var + EPS)                                     # (1, in_f)
    w1f = s.reshape(in_f, 1) * params["w1"]                          # (in_f, h1)
    b1f = params["b1"] - (mean * s) @ params["w1"]                   # (1, h1)

    # ---- Lane-dense row packing (free contiguous reshape) + block-diagonal
    # weights so the whole matmul chain stays packed end-to-end.
    pack = 128 // in_f if (in_f <= 128 and 128 % in_f == 0) else 1

    cdt = COMPUTE_DTYPE
    w1p = _block_diag(w1f.astype(cdt), pack)            # (pack*in_f, pack*h1)
    w2p = _block_diag(params["w2"].astype(cdt), pack)   # (pack*h1,  pack*h2)
    w3p = _block_diag(params["w3"].astype(cdt), pack)   # (pack*h2,  pack*out_f)
    b1p = jnp.tile(b1f.astype(jnp.float32), (1, pack))
    b2p = jnp.tile(params["b2"].astype(jnp.float32), (1, pack))
    b3p = jnp.tile(params["b3"].astype(jnp.float32), (1, pack))

    n_pad = _round_up(n, pack * 8)                      # packed rows: multiple of 8
    x_pad = jnp.pad(x2.astype(cdt), ((0, n_pad - n), (0, 0)))
    n_packed = n_pad // pack
    x_packed = x_pad.reshape(n_packed, pack * in_f)     # (N/8, 128) for in_f=16

    # ---- Row tiling.  Cap the tile at ceil(n_packed/2) so the "parallel" axis
    # always has >= 2 grid steps when there is enough work (v7x megacore uses
    # both TensorCores); no cost on single-TC v5e/v6e.
    tile = min(MAX_TILE_PACKED, _round_up(pl.cdiv(n_packed, 2), 8))
    grid = (pl.cdiv(n_packed, tile),)

    itemsize = jnp.dtype(cdt).itemsize
    k1, k2, k3, k4 = pack * in_f, pack * h1, pack * h2, pack * out_f
    flops = 2 * n_packed * (k1 * k2 + k2 * k3 + k3 * k4)
    bytes_accessed = (n_packed * k1 * itemsize + n_packed * k4 * 4
                      + (k1 * k2 + k2 * k3 + k3 * k4) * itemsize
                      + (k2 + k3 + k4) * 4)

    def const(shape):
        # Full-array block, DMA'd once, VMEM-resident across the whole row grid.
        return pl.BlockSpec(shape, lambda i: (0, 0))

    out_packed = pl.pallas_call(
        _mlp_kernel,
        out_shape=jax.ShapeDtypeStruct((n_packed, k4), jnp.float32),
        grid=grid,
        in_specs=[
            pl.BlockSpec((tile, k1), lambda i: (i, 0)),   # x, row-tiled, lane-dense
            const((k1, k2)), const((1, k2)),              # blockdiag(W1'), b1'
            const((k2, k3)), const((1, k3)),              # blockdiag(W2),  b2
            const((k3, k4)), const((1, k4)),              # blockdiag(W3),  b3
        ],
        out_specs=pl.BlockSpec((tile, k4), lambda i: (i, 0)),
        compiler_params=pltpu.CompilerParams(
            dimension_semantics=("parallel",),   # megacore sharding on v7x
            vmem_limit_bytes=32 * 1024 * 1024,
        ),
        cost_estimate=pl.CostEstimate(
            flops=flops, transcendentals=0, bytes_accessed=bytes_accessed),
    )(x_packed, w1p, b1p, w2p, b2p, w3p, b3p)

    out = out_packed.reshape(n_pad, out_f)[:n]           # un-pack (free) + drop pad
    if len(orig_shape) == 3:
        out = out.reshape(orig_shape[:-1] + (out_f,))
    return out


def init_params(key, input_size, hidden_size, output_size):
    """Deterministic synthetic init.  Weights stored as (in, out) = W.T of nn.Linear."""
    dims = [input_size] + list(hidden_size) + [output_size]
    params = {}
    for i in range(len(dims) - 1):
        key, kw, kb = jax.random.split(key, 3)
        fan_in = dims[i]
        bound = 1.0 / jnp.sqrt(fan_in)
        params[f"w{i + 1}"] = jax.random.uniform(
            kw, (dims[i], dims[i + 1]), jnp.float32, -bound, bound)
        params[f"b{i + 1}"] = jax.random.uniform(
            kb, (1, dims[i + 1]), jnp.float32, -bound, bound)
    return params


def _reference_forward(x, params):
    """Pure-JAX reference mirroring the torch forward (training-mode BN)."""
    orig_shape = x.shape
    x2 = x.reshape((-1, x.shape[-1])) if x.ndim == 3 else x
    mean = jnp.mean(x2, axis=0, keepdims=True)
    var = jnp.mean((x2 - mean) ** 2, axis=0, keepdims=True)
    h = (x2 - mean) / jnp.sqrt(var + EPS)
    h = jnp.maximum(h @ params["w1"] + params["b1"], 0.0)
    h = jnp.maximum(h @ params["w2"] + params["b2"], 0.0)
    out = h @ params["w3"] + params["b3"]
    if len(orig_shape) == 3:
        out = out.reshape(orig_shape[:-1] + (out.shape[-1],))
    return out


if __name__ == "__main__":
    input_size, hidden_size, output_size = 16, [32, 32], 8
    key = jax.random.PRNGKey(0)
    key, kx1, kx2 = jax.random.split(key, 3)
    params = init_params(key, input_size, hidden_size, output_size)

    # Small 3-D input (batch=2, seq=4, features=16): exercises the reshape branch
    # and the row-padding path (8 real rows padded to one packed tile).
    x_small = jax.random.normal(kx1, (2, 4, input_size), jnp.float32)
    out_small = jax.block_until_ready(simple_model_forward(x_small, params))
    ref_small = _reference_forward(x_small, params)
    assert out_small.shape == (2, 4, output_size)
    assert jnp.allclose(out_small, ref_small, atol=1e-3, rtol=1e-3)

    # Larger 2-D input: exercises the multi-step row grid (2 tiles of 256 packed rows).
    x_big = jax.random.normal(kx2, (4096, input_size), jnp.float32)
    out_big = jax.block_until_ready(simple_model_forward(x_big, params))
    ref_big = _reference_forward(x_big, params)
    assert out_big.shape == (4096, output_size)
    assert jnp.allclose(out_big, ref_big, atol=1e-3, rtol=1e-3)

    print("KERNEL_OK")
</pallas_src>

<mosaic_0001>
module attributes {stable_mosaic.version = 11 : i64} {
  func.func @_mlp_kernel(%arg0: i32, %arg1: memref<8x128xf32, #tpu.memory_space<vmem>>, %arg2: memref<128x256xf32, #tpu.memory_space<vmem>>, %arg3: memref<1x256xf32, #tpu.memory_space<vmem>>, %arg4: memref<256x256xf32, #tpu.memory_space<vmem>>, %arg5: memref<1x256xf32, #tpu.memory_space<vmem>>, %arg6: memref<256x64xf32, #tpu.memory_space<vmem>>, %arg7: memref<1x64xf32, #tpu.memory_space<vmem>>, %arg8: memref<8x64xf32, #tpu.memory_space<vmem>>) attributes {dimension_semantics = [#tpu.dimension_semantics<parallel>], iteration_bounds = array<i64: 1>, scalar_prefetch = 0 : i64, scratch_operands = 0 : i64, tpu.core_type = #tpu.core_type<tc>, window_params = [{transform_indices = @transform_0, window_bounds = array<i64: 8, 128>}, {pipeline_mode = #tpu.pipeline_mode<synchronous>, transform_indices = @transform_1, window_bounds = array<i64: 128, 256>}, {pipeline_mode = #tpu.pipeline_mode<synchronous>, transform_indices = @transform_2, window_bounds = array<i64: 1, 256>}, {pipeline_mode = #tpu.pipeline_mode<synchronous>, transform_indices = @transform_3, window_bounds = array<i64: 256, 256>}, {pipeline_mode = #tpu.pipeline_mode<synchronous>, transform_indices = @transform_4, window_bounds = array<i64: 1, 256>}, {pipeline_mode = #tpu.pipeline_mode<synchronous>, transform_indices = @transform_5, window_bounds = array<i64: 256, 64>}, {pipeline_mode = #tpu.pipeline_mode<synchronous>, transform_indices = @transform_6, window_bounds = array<i64: 1, 64>}, {transform_indices = @transform_7, window_bounds = array<i64: 8, 64>}]} {
    %c0 = arith.constant 0 : index
    %c0_0 = arith.constant 0 : index
    %0 = vector.load %arg1[%c0, %c0_0] : memref<8x128xf32, #tpu.memory_space<vmem>>, vector<8x128xf32>
    %c0_1 = arith.constant 0 : index
    %c0_2 = arith.constant 0 : index
    %1 = vector.load %arg2[%c0_1, %c0_2] : memref<128x256xf32, #tpu.memory_space<vmem>>, vector<128x256xf32>
    %cst = arith.constant dense<0.000000e+00> : vector<8x256xf32>
    %2 = tpu.matmul %0, %1, %cst {dimension_numbers = #tpu.dot_dimension_numbers<[1], [0], [0], [1], [0, 0, 1, 1], [], []>} : vector<8x128xf32>, vector<128x256xf32>, vector<8x256xf32> -> vector<8x256xf32>
    %c0_3 = arith.constant 0 : index
    %c0_4 = arith.constant 0 : index
    %3 = vector.load %arg3[%c0_3, %c0_4] : memref<1x256xf32, #tpu.memory_space<vmem>>, vector<1x256xf32>
    %4 = vector.broadcast %3 : vector<1x256xf32> to vector<8x256xf32>
    %5 = arith.addf %2, %4 : vector<8x256xf32>
    %cst_5 = arith.constant 0.000000e+00 : f32
    %6 = vector.broadcast %cst_5 : f32 to vector<8x256xf32>
    %7 = arith.maximumf %5, %6 : vector<8x256xf32>
    %c0_6 = arith.constant 0 : index
    %c0_7 = arith.constant 0 : index
    %8 = vector.load %arg4[%c0_6, %c0_7] : memref<256x256xf32, #tpu.memory_space<vmem>>, vector<256x256xf32>
    %cst_8 = arith.constant dense<0.000000e+00> : vector<8x256xf32>
    %9 = tpu.matmul %7, %8, %cst_8 {dimension_numbers = #tpu.dot_dimension_numbers<[1], [0], [0], [1], [0, 0, 1, 1], [], []>} : vector<8x256xf32>, vector<256x256xf32>, vector<8x256xf32> -> vector<8x256xf32>
    %c0_9 = arith.constant 0 : index
    %c0_10 = arith.constant 0 : index
    %10 = vector.load %arg5[%c0_9, %c0_10] : memref<1x256xf32, #tpu.memory_space<vmem>>, vector<1x256xf32>
    %11 = vector.broadcast %10 : vector<1x256xf32> to vector<8x256xf32>
    %12 = arith.addf %9, %11 : vector<8x256xf32>
    %cst_11 = arith.constant 0.000000e+00 : f32
    %13 = vector.broadcast %cst_11 : f32 to vector<8x256xf32>
    %14 = arith.maximumf %12, %13 : vector<8x256xf32>
    %c0_12 = arith.constant 0 : index
    %c0_13 = arith.constant 0 : index
    %15 = vector.load %arg6[%c0_12, %c0_13] : memref<256x64xf32, #tpu.memory_space<vmem>>, vector<256x64xf32>
    %cst_14 = arith.constant dense<0.000000e+00> : vector<8x64xf32>
    %16 = tpu.matmul %14, %15, %cst_14 {dimension_numbers = #tpu.dot_dimension_numbers<[1], [0], [0], [1], [0, 0, 1, 1], [], []>} : vector<8x256xf32>, vector<256x64xf32>, vector<8x64xf32> -> vector<8x64xf32>
    %c0_15 = arith.constant 0 : index
    %c0_16 = arith.constant 0 : index
    %17 = vector.load %arg7[%c0_15, %c0_16] : memref<1x64xf32, #tpu.memory_space<vmem>>, vector<1x64xf32>
    %18 = vector.broadcast %17 : vector<1x64xf32> to vector<8x64xf32>
    %19 = arith.addf %16, %18 : vector<8x64xf32>
    %c0_17 = arith.constant 0 : index
    %c0_18 = arith.constant 0 : index
    %20 = vector.load %arg8[%c0_17, %c0_18] : memref<8x64xf32, #tpu.memory_space<vmem>>, vector<8x64xf32>
    tpu.vector_store %arg8[%c0_17, %c0_18], %19 {strides = array<i32>} : memref<8x64xf32, #tpu.memory_space<vmem>>, vector<8x64xf32>,
    return
  }
  func.func @transform_0(%arg0: i32) -> (i32, i32) {
    %c0_i32 = arith.constant 0 : i32
    %c0_i32_0 = arith.constant 0 : i32
    return %arg0, %c0_i32 : i32, i32
  }
  func.func @transform_1(%arg0: i32) -> (i32, i32) {
    %c0_i32 = arith.constant 0 : i32
    %c0_i32_0 = arith.constant 0 : i32
    %c0_i32_1 = arith.constant 0 : i32
    return %c0_i32, %c0_i32_0 : i32, i32
  }
  func.func @transform_2(%arg0: i32) -> (i32, i32) {
    %c0_i32 = arith.constant 0 : i32
    %c0_i32_0 = arith.constant 0 : i32
    %c0_i32_1 = arith.constant 0 : i32
    return %c0_i32, %c0_i32_0 : i32, i32
  }
  func.func @transform_3(%arg0: i32) -> (i32, i32) {
    %c0_i32 = arith.constant 0 : i32
    %c0_i32_0 = arith.constant 0 : i32
    %c0_i32_1 = arith.constant 0 : i32
    return %c0_i32, %c0_i32_0 : i32, i32
  }
  func.func @transform_4(%arg0: i32) -> (i32, i32) {
    %c0_i32 = arith.constant 0 : i32
    %c0_i32_0 = arith.constant 0 : i32
    %c0_i32_1 = arith.constant 0 : i32
    return %c0_i32, %c0_i32_0 : i32, i32
  }
  func.func @transform_5(%arg0: i32) -> (i32, i32) {
    %c0_i32 = arith.constant 0 : i32
    %c0_i32_0 = arith.constant 0 : i32
    %c0_i32_1 = arith.constant 0 : i32
    return %c0_i32, %c0_i32_0 : i32, i32
  }
  func.func @transform_6(%arg0: i32) -> (i32, i32) {
    %c0_i32 = arith.constant 0 : i32
    %c0_i32_0 = arith.constant 0 : i32
    %c0_i32_1 = arith.constant 0 : i32
    return %c0_i32, %c0_i32_0 : i32, i32
  }
  func.func @transform_7(%arg0: i32) -> (i32, i32) {
    %c0_i32 = arith.constant 0 : i32
    %c0_i32_0 = arith.constant 0 : i32
    return %arg0, %c0_i32 : i32, i32
  }
}

</mosaic_0001>

<llo_original>
// kernel: simple_model_forward.1
$region0: #{simple_model_forward.1}
  #allocation0 [shape = 'u32[]', space=smem, size = 0x4, offset = 0x4, fixed_abs, tag = 'smem constant byte address 0x4 - core index']
  #allocation1 [shape = 'u32[144,128]{1,0:T(1,128)}', space=vmem, size = 0x12000, scoped, tag = 'internal scratch']
  %s0 = inlined_call_operand.vmem [shape: f32[8,128], index: 0, kind: input, shape index: {}]
  %s1 = inlined_call_operand.vmem [shape: f32[128,256], index: 1, kind: input, shape index: {}]
  %s2 = inlined_call_operand.vmem [shape: f32[1,256], index: 2, kind: input, shape index: {}]
  %s3 = inlined_call_operand.vmem [shape: f32[256,256], index: 3, kind: input, shape index: {}]
  %s4 = inlined_call_operand.vmem [shape: f32[1,256], index: 4, kind: input, shape index: {}]
  %s5 = inlined_call_operand.vmem [shape: f32[256,64], index: 5, kind: input, shape index: {}]
  %s6 = inlined_call_operand.vmem [shape: f32[1,64], index: 6, kind: input, shape index: {}]
  %s7 = inlined_call_operand.vmem [shape: f32[8,64], index: 7, kind: output, shape index: {}]
  %s8 = sld [smem:[#allocation0]]
  $region38: #{simple_model_forward.1} parent=0
    _
  %s10 = ssub.s32 1, %s8
  %s11 = scalar_select 0, %s10, %s8
  // Predicated region
  $region2: #{simple_model_forward.1} parent=0 // pred_check
    _
  $region3: #{simple_model_forward.1} parent=0 // pred_check_branch
    %13 = sbr.rel (0) target = $region5
  $region4: #{simple_model_forward.1} parent=0 // pred_region
    _
  $region5: #{simple_model_forward.1} parent=0 // pred_fallthru
    _
  // Predicated region
  $region6: #{simple_model_forward.1} parent=0 // pred_check
    _
  $region7: #{simple_model_forward.1} parent=0 // pred_check_branch
    %15 = sbr.rel (0) target = $region9
  $region8: #{simple_model_forward.1} parent=0 // pred_region
    _
  $region9: #{simple_model_forward.1} parent=0 // pred_fallthru
    _
  // Predicated region
  $region10: #{simple_model_forward.1} parent=0 // pred_check
    _
  $region11: #{simple_model_forward.1} parent=0 // pred_check_branch
    %17 = sbr.rel (0) target = $region13
  $region12: #{simple_model_forward.1} parent=0 // pred_region
    _
  $region13: #{simple_model_forward.1} parent=0 // pred_fallthru
    _
  // Predicated region
  $region14: #{simple_model_forward.1} parent=0 // pred_check
    _
  $region15: #{simple_model_forward.1} parent=0 // pred_check_branch
    %19 = sbr.rel (0) target = $region17
  $region16: #{simple_model_forward.1} parent=0 // pred_region
    _
  $region17: #{simple_model_forward.1} parent=0 // pred_fallthru
    _
  // Predicated region
  $region18: #{simple_model_forward.1} parent=0 // pred_check
    _
  $region19: #{simple_model_forward.1} parent=0 // pred_check_branch
    %21 = sbr.rel (0) target = $region21
  $region20: #{simple_model_forward.1} parent=0 // pred_region
    _
  $region21: #{simple_model_forward.1} parent=0 // pred_fallthru
    _
  // Predicated region
  $region22: #{simple_model_forward.1} parent=0 // pred_check
    _
  $region23: #{simple_model_forward.1} parent=0 // pred_check_branch
    %23 = sbr.rel (0) target = $region25
  $region24: #{simple_model_forward.1} parent=0 // pred_region
    _
  $region25: #{simple_model_forward.1} parent=0 // pred_fallthru
    _
  // Predicated region
  $region26: #{simple_model_forward.1} parent=0 // pred_check
    _
  $region27: #{simple_model_forward.1} parent=0 // pred_check_branch
    %25 = sbr.rel (0) target = $region29
  $region28: #{simple_model_forward.1} parent=0 // pred_region
    _
  $region29: #{simple_model_forward.1} parent=0 // pred_fallthru
    _
  %v26 = vld [vmem:[%s0] sm:$0xff]
  %v27 = vld [vmem:[%s1] sm:$0xff]
  %v28 = vld [vmem:[%s1 + $0x8] sm:$0xff]
  %v29 = vld [vmem:[%s1 + $0x10] sm:$0xff]
  %v30 = vld [vmem:[%s1 + $0x18] sm:$0xff]
  %v31 = vld [vmem:[%s1 + $0x20] sm:$0xff]
  %v32 = vld [vmem:[%s1 + $0x28] sm:$0xff]
  %v33 = vld [vmem:[%s1 + $0x30] sm:$0xff]
  %v34 = vld [vmem:[%s1 + $0x38] sm:$0xff]
  %v35 = vld [vmem:[%s1 + $0x40] sm:$0xff]
  %v36 = vld [vmem:[%s1 + $0x48] sm:$0xff]
  %v37 = vld [vmem:[%s1 + $0x50] sm:$0xff]
  %v38 = vld [vmem:[%s1 + $0x58] sm:$0xff]
  %v39 = vld [vmem:[%s1 + $0x60] sm:$0xff]
  %v40 = vld [vmem:[%s1 + $0x68] sm:$0xff]
  %v41 = vld [vmem:[%s1 + $0x70] sm:$0xff]
  %v42 = vld [vmem:[%s1 + $0x78] sm:$0xff]
  %v43 = vld [vmem:[%s1 + $0x80] sm:$0xff]
  %v44 = vld [vmem:[%s1 + $0x88] sm:$0xff]
  %v45 = vld [vmem:[%s1 + $0x90] sm:$0xff]
  %v46 = vld [vmem:[%s1 + $0x98] sm:$0xff]
  %v47 = vld [vmem:[%s1 + $0xa0] sm:$0xff]
  %v48 = vld [vmem:[%s1 + $0xa8] sm:$0xff]
  %v49 = vld [vmem:[%s1 + $0xb0] sm:$0xff]
  %v50 = vld [vmem:[%s1 + $0xb8] sm:$0xff]
  %v51 = vld [vmem:[%s1 + $0xc0] sm:$0xff]
  %v52 = vld [vmem:[%s1 + $0xc8] sm:$0xff]
  %v53 = vld [vmem:[%s1 + $0xd0] sm:$0xff]
  %v54 = vld [vmem:[%s1 + $0xd8] sm:$0xff]
  %v55 = vld [vmem:[%s1 + $0xe0] sm:$0xff]
  %v56 = vld [vmem:[%s1 + $0xe8] sm:$0xff]
  %v57 = vld [vmem:[%s1 + $0xf0] sm:$0xff]
  %v58 = vld [vmem:[%s1 + $0xf8] sm:$0xff]
  %v59 = vld [vmem:[%s2] sm:$0x3]
  %v61 = vlaneseq
  %v62 = vshrl.u32 %v61, 7
  %v63 = vsub.s32 0, %v62
  %v64 = vrot.slane %v59, %v63
  %v65 = vlaneseq
  %v66 = vshrl.u32 %v65, 7
  %v67 = vsub.s32 1, %v66
  %v68 = vrot.slane %v59, %v67
  %71 = vmatprep.subr.mxu0 %v28
  %72 = vmatpush1.msra.mxu0 %v27
  %73 = vmatprep.subr.mxu0 %v30
  %74 = vmatpush1.msra.mxu0 %v29
  %75 = vmatprep.subr.mxu0 %v32
  %76 = vmatpush1.msra.mxu0 %v31
  %77 = vmatprep.subr.mxu0 %v34
  %78 = vmatpush1.msra.mxu0 %v33
  %79 = vmatprep.subr.mxu0 %v36
  %80 = vmatpush1.msra.mxu0 %v35
  %81 = vmatprep.subr.mxu0 %v38
  %82 = vmatpush1.msra.mxu0 %v37
  %83 = vmatprep.subr.mxu0 %v40
  %84 = vmatpush1.msra.mxu0 %v39
  %85 = vmatprep.subr.mxu0 %v42
  %86 = vmatpush1.msra.mxu0 %v41
  %87 = vmatprep.subr.mxu0 %v44
  %88 = vmatpush1.msra.mxu0 %v43
  %89 = vmatprep.subr.mxu0 %v46
  %90 = vmatpush1.msra.mxu0 %v45
  %91 = vmatprep.subr.mxu0 %v48
  %92 = vmatpush1.msra.mxu0 %v47
  %93 = vmatprep.subr.mxu0 %v50
  %94 = vmatpush1.msra.mxu0 %v49
  %95 = vmatprep.subr.mxu0 %v52
  %96 = vmatpush1.msra.mxu0 %v51
  %97 = vmatprep.subr.mxu0 %v54
  %98 = vmatpush1.msra.mxu0 %v53
  %99 = vmatprep.subr.mxu0 %v56
  %100 = vmatpush1.msra.mxu0 %v55
  %101 = vmatprep.subr.mxu0 %v58
  %102 = vmatpush1.msra.mxu0 %v57
  %103 = vmatprep.subr.mxu0 0.0
  %104 = vmatpush1.msra.mxu0 0.0
  %105 = vmatprep.subr.mxu0 0.0
  %106 = vmatpush1.msra.mxu0 0.0
  %107 = vmatprep.subr.mxu0 0.0
  %108 = vmatpush1.msra.mxu0 0.0
  %109 = vmatprep.subr.mxu0 0.0
  %110 = vmatpush1.msra.mxu0 0.0
  %111 = vmatprep.subr.mxu0 0.0
  %112 = vmatpush1.msra.mxu0 0.0
  %113 = vmatprep.subr.mxu0 0.0
  %114 = vmatpush1.msra.mxu0 0.0
  %115 = vmatprep.subr.mxu0 0.0
  %116 = vmatpush1.msra.mxu0 0.0
  %117 = vmatprep.subr.mxu0 0.0
  %118 = vmatpush1.msra.mxu0 0.0
  %119 = vmatprep.subr.mxu0 0.0
  %120 = vmatpush1.msra.mxu0 0.0
  %121 = vmatprep.subr.mxu0 0.0
  %122 = vmatpush1.msra.mxu0 0.0
  %123 = vmatprep.subr.mxu0 0.0
  %124 = vmatpush1.msra.mxu0 0.0
  %125 = vmatprep.subr.mxu0 0.0
  %126 = vmatpush1.msra.mxu0 0.0
  %127 = vmatprep.subr.mxu0 0.0
  %128 = vmatpush1.msra.mxu0 0.0
  %129 = vmatprep.subr.mxu0 0.0
  %130 = vmatpush1.msra.mxu0 0.0
  %131 = vmatprep.subr.mxu0 0.0
  %132 = vmatpush1.msra.mxu0 0.0
  %133 = vmatprep.subr.mxu0 0.0
  %134 = vmatpush1.msra.mxu0 0.0
  %135 = vmatprep.mubr.f32.mxu0 0.0
  %136 = vmatmul.mubr.f32.gmra.mrb[0].mxu0 %v26
  %v137 = vpop.f32.mrb[0].mxu0
  %v138 = vadd.f32 %v64, %v137
  %v139 = vpop.f32.mrb[0].mxu0
  %v140 = vadd.f32 %v68, %v139
  %141 = vdwg.mxu0
  %v142 = vmax.f32 %v138, 0.0
  %v143 = vmax.f32 %v140, 0.0
  %v144 = vld [vmem:[%s3] sm:$0xff]
  %v145 = vld [vmem:[%s3 + $0x8] sm:$0xff]
  %v146 = vld [vmem:[%s3 + $0x10] sm:$0xff]
  %v147 = vld [vmem:[%s3 + $0x18] sm:$0xff]
  %v148 = vld [vmem:[%s3 + $0x20] sm:$0xff]
  %v149 = vld [vmem:[%s3 + $0x28] sm:$0xff]
  %v150 = vld [vmem:[%s3 + $0x30] sm:$0xff]
  %v151 = vld [vmem:[%s3 + $0x38] sm:$0xff]
  %v152 = vld [vmem:[%s3 + $0x40] sm:$0xff]
  %v153 = vld [vmem:[%s3 + $0x48] sm:$0xff]
  %v154 = vld [vmem:[%s3 + $0x50] sm:$0xff]
  %v155 = vld [vmem:[%s3 + $0x58] sm:$0xff]
  %v156 = vld [vmem:[%s3 + $0x60] sm:$0xff]
  %v157 = vld [vmem:[%s3 + $0x68] sm:$0xff]
  %v158 = vld [vmem:[%s3 + $0x70] sm:$0xff]
  %v159 = vld [vmem:[%s3 + $0x78] sm:$0xff]
  %v160 = vld [vmem:[%s3 + $0x80] sm:$0xff]
  %v161 = vld [vmem:[%s3 + $0x88] sm:$0xff]
  %v162 = vld [vmem:[%s3 + $0x90] sm:$0xff]
  %v163 = vld [vmem:[%s3 + $0x98] sm:$0xff]
  %v164 = vld [vmem:[%s3 + $0xa0] sm:$0xff]
  %v165 = vld [vmem:[%s3 + $0xa8] sm:$0xff]
  %v166 = vld [vmem:[%s3 + $0xb0] sm:$0xff]
  %v167 = vld [vmem:[%s3 + $0xb8] sm:$0xff]
  %v168 = vld [vmem:[%s3 + $0xc0] sm:$0xff]
  %v169 = vld [vmem:[%s3 + $0xc8] sm:$0xff]
  %v170 = vld [vmem:[%s3 + $0xd0] sm:$0xff]
  %v171 = vld [vmem:[%s3 + $0xd8] sm:$0xff]
  %v172 = vld [vmem:[%s3 + $0xe0] sm:$0xff]
  %v173 = vld [vmem:[%s3 + $0xe8] sm:$0xff]
  %v174 = vld [vmem:[%s3 + $0xf0] sm:$0xff]
  %v175 = vld [vmem:[%s3 + $0xf8] sm:$0xff]
  %v176 = vld [vmem:[%s3 + $0x100] sm:$0xff]
  %v177 = vld [vmem:[%s3 + $0x108] sm:$0xff]
  %v178 = vld [vmem:[%s3 + $0x110] sm:$0xff]
  %v179 = vld [vmem:[%s3 + $0x118] sm:$0xff]
  %v180 = vld [vmem:[%s3 + $0x120] sm:$0xff]
  %v181 = vld [vmem:[%s3 + $0x128] sm:$0xff]
  %v182 = vld [vmem:[%s3 + $0x130] sm:$0xff]
  %v183 = vld [vmem:[%s3 + $0x138] sm:$0xff]
  %v184 = vld [vmem:[%s3 + $0x140] sm:$0xff]
  %v185 = vld [vmem:[%s3 + $0x148] sm:$0xff]
  %v186 = vld [vmem:[%s3 + $0x150] sm:$0xff]
  %v187 = vld [vmem:[%s3 + $0x158] sm:$0xff]
  %v188 = vld [vmem:[%s3 + $0x160] sm:$0xff]
  %v189 = vld [vmem:[%s3 + $0x168] sm:$0xff]
  %v190 = vld [vmem:[%s3 + $0x170] sm:$0xff]
  %v191 = vld [vmem:[%s3 + $0x178] sm:$0xff]
  %v192 = vld [vmem:[%s3 + $0x180] sm:$0xff]
  %v193 = vld [vmem:[%s3 + $0x188] sm:$0xff]
  %v194 = vld [vmem:[%s3 + $0x190] sm:$0xff]
  %v195 = vld [vmem:[%s3 + $0x198] sm:$0xff]
  %v196 = vld [vmem:[%s3 + $0x1a0] sm:$0xff]
  %v197 = vld [vmem:[%s3 + $0x1a8] sm:$0xff]
  %v198 = vld [vmem:[%s3 + $0x1b0] sm:$0xff]
  %v199 = vld [vmem:[%s3 + $0x1b8] sm:$0xff]
  %v200 = vld [vmem:[%s3 + $0x1c0] sm:$0xff]
  %v201 = vld [vmem:[%s3 + $0x1c8] sm:$0xff]
  %v202 = vld [vmem:[%s3 + $0x1d0] sm:$0xff]
  %v203 = vld [vmem:[%s3 + $0x1d8] sm:$0xff]
  %v204 = vld [vmem:[%s3 + $0x1e0] sm:$0xff]
  %v205 = vld [vmem:[%s3 + $0x1e8] sm:$0xff]
  %v206 = vld [vmem:[%s3 + $0x1f0] sm:$0xff]
  %v207 = vld [vmem:[%s3 + $0x1f8] sm:$0xff]
  %v208 = vld [vmem:[%s4] sm:$0x3]
  %v210 = vlaneseq
  %v211 = vshrl.u32 %v210, 7
  %v212 = vsub.s32 0, %v211
  %v213 = vrot.slane %v208, %v212
  %v214 = vlaneseq
  %v215 = vshrl.u32 %v214, 7
  %v216 = vsub.s32 1, %v215
  %v217 = vrot.slane %v208, %v216
  %220 = vmatprep.subr.mxu0 %v145
  %221 = vmatpush1.msra.mxu0 %v144
  %222 = vmatprep.subr.mxu0 %v147
  %223 = vmatpush1.msra.mxu0 %v146
  %224 = vmatprep.subr.mxu0 %v149
  %225 = vmatpush1.msra.mxu0 %v148
  %226 = vmatprep.subr.mxu0 %v151
  %227 = vmatpush1.msra.mxu0 %v150
  %228 = vmatprep.subr.mxu0 %v153
  %229 = vmatpush1.msra.mxu0 %v152
  %230 = vmatprep.subr.mxu0 %v155
  %231 = vmatpush1.msra.mxu0 %v154
  %232 = vmatprep.subr.mxu0 %v157
  %233 = vmatpush1.msra.mxu0 %v156
  %234 = vmatprep.subr.mxu0 %v159
  %235 = vmatpush1.msra.mxu0 %v158
  %236 = vmatprep.subr.mxu0 %v161
  %237 = vmatpush1.msra.mxu0 %v160
  %238 = vmatprep.subr.mxu0 %v163
  %239 = vmatpush1.msra.mxu0 %v162
  %240 = vmatprep.subr.mxu0 %v165
  %241 = vmatpush1.msra.mxu0 %v164
  %242 = vmatprep.subr.mxu0 %v167
  %243 = vmatpush1.msra.mxu0 %v166
  %244 = vmatprep.subr.mxu0 %v169
  %245 = vmatpush1.msra.mxu0 %v168
  %246 = vmatprep.subr.mxu0 %v171
  %247 = vmatpush1.msra.mxu0 %v170
  %248 = vmatprep.subr.mxu0 %v173
  %249 = vmatpush1.msra.mxu0 %v172
  %250 = vmatprep.subr.mxu0 %v175
  %251 = vmatpush1.msra.mxu0 %v174
  %252 = vmatprep.subr.mxu0 %v177
  %253 = vmatpush1.msra.mxu0 %v176
  %254 = vmatprep.subr.mxu0 %v179
  %255 = vmatpush1.msra.mxu0 %v178
  %256 = vmatprep.subr.mxu0 %v181
  %257 = vmatpush1.msra.mxu0 %v180
  %258 = vmatprep.subr.mxu0 %v183
  %259 = vmatpush1.msra.mxu0 %v182
  %260 = vmatprep.subr.mxu0 %v185
  %261 = vmatpush1.msra.mxu0 %v184
  %262 = vmatprep.subr.mxu0 %v187
  %263 = vmatpush1.msra.mxu0 %v186
  %264 = vmatprep.subr.mxu0 %v189
  %265 = vmatpush1.msra.mxu0 %v188
  %266 = vmatprep.subr.mxu0 %v191
  %267 = vmatpush1.msra.mxu0 %v190
  %268 = vmatprep.subr.mxu0 %v193
  %269 = vmatpush1.msra.mxu0 %v192
  %270 = vmatprep.subr.mxu0 %v195
  %271 = vmatpush1.msra.mxu0 %v194
  %272 = vmatprep.subr.mxu0 %v197
  %273 = vmatpush1.msra.mxu0 %v196
  %274 = vmatprep.subr.mxu0 %v199
  %275 = vmatpush1.msra.mxu0 %v198
  %276 = vmatprep.subr.mxu0 %v201
  %277 = vmatpush1.msra.mxu0 %v200
  %278 = vmatprep.subr.mxu0 %v203
  %279 = vmatpush1.msra.mxu0 %v202
  %280 = vmatprep.subr.mxu0 %v205
  %281 = vmatpush1.msra.mxu0 %v204
  %282 = vmatprep.subr.mxu0 %v207
  %283 = vmatpush1.msra.mxu0 %v206
  %284 = vmatprep.mubr.f32.mxu0 %v143
  %285 = vmatmul.mubr.f32.gmra.mrb[0].mxu0 %v142
  %v286 = vpop.f32.mrb[0].mxu0
  %v287 = vadd.f32 %v213, %v286
  %v288 = vpop.f32.mrb[0].mxu0
  %v289 = vadd.f32 %v217, %v288
  %290 = vdwg.mxu0
  %v291 = vmax.f32 %v287, 0.0
  %v292 = vmax.f32 %v289, 0.0
  %v293 = vld [vmem:[%s5] sm:$0xff]
  %v294 = vld [vmem:[%s5 + $0x8] sm:$0xff]
  %v295 = vld [vmem:[%s5 + $0x10] sm:$0xff]
  %v296 = vld [vmem:[%s5 + $0x18] sm:$0xff]
  %v297 = vld [vmem:[%s5 + $0x20] sm:$0xff]
  %v298 = vld [vmem:[%s5 + $0x28] sm:$0xff]
  %v299 = vld [vmem:[%s5 + $0x30] sm:$0xff]
  %v300 = vld [vmem:[%s5 + $0x38] sm:$0xff]
  %v301 = vld [vmem:[%s5 + $0x40] sm:$0xff]
  %v302 = vld [vmem:[%s5 + $0x48] sm:$0xff]
  %v303 = vld [vmem:[%s5 + $0x50] sm:$0xff]
  %v304 = vld [vmem:[%s5 + $0x58] sm:$0xff]
  %v305 = vld [vmem:[%s5 + $0x60] sm:$0xff]
  %v306 = vld [vmem:[%s5 + $0x68] sm:$0xff]
  %v307 = vld [vmem:[%s5 + $0x70] sm:$0xff]
  %v308 = vld [vmem:[%s5 + $0x78] sm:$0xff]
  %v309 = vld [vmem:[%s5 + $0x80] sm:$0xff]
  %v310 = vld [vmem:[%s5 + $0x88] sm:$0xff]
  %v311 = vld [vmem:[%s5 + $0x90] sm:$0xff]
  %v312 = vld [vmem:[%s5 + $0x98] sm:$0xff]
  %v313 = vld [vmem:[%s5 + $0xa0] sm:$0xff]
  %v314 = vld [vmem:[%s5 + $0xa8] sm:$0xff]
  %v315 = vld [vmem:[%s5 + $0xb0] sm:$0xff]
  %v316 = vld [vmem:[%s5 + $0xb8] sm:$0xff]
  %v317 = vld [vmem:[%s5 + $0xc0] sm:$0xff]
  %v318 = vld [vmem:[%s5 + $0xc8] sm:$0xff]
  %v319 = vld [vmem:[%s5 + $0xd0] sm:$0xff]
  %v320 = vld [vmem:[%s5 + $0xd8] sm:$0xff]
  %v321 = vld [vmem:[%s5 + $0xe0] sm:$0xff]
  %v322 = vld [vmem:[%s5 + $0xe8] sm:$0xff]
  %v323 = vld [vmem:[%s5 + $0xf0] sm:$0xff]
  %v324 = vld [vmem:[%s5 + $0xf8] sm:$0xff]
  %v325 = vld [vmem:[%s6] sm:$0x1]
  %v327 = vlaneseq
  %v328 = vshrl.u32 %v327, 7
  %v329 = vsub.s32 0, %v328
  %v330 = vrot.slane %v325, %v329
  %332 = vmatprep.subr.mxu0 0.0
  %333 = vmatpush1.msra.mxu0 %v293
  %334 = vmatprep.subr.mxu0 0.0
  %335 = vmatpush1.msra.mxu0 %v294
  %336 = vmatprep.subr.mxu0 0.0
  %337 = vmatpush1.msra.mxu0 %v295
  %338 = vmatprep.subr.mxu0 0.0
  %339 = vmatpush1.msra.mxu0 %v296
  %340 = vmatprep.subr.mxu0 0.0
  %341 = vmatpush1.msra.mxu0 %v297
  %342 = vmatprep.subr.mxu0 0.0
  %343 = vmatpush1.msra.mxu0 %v298
  %344 = vmatprep.subr.mxu0 0.0
  %345 = vmatpush1.msra.mxu0 %v299
  %346 = vmatprep.subr.mxu0 0.0
  %347 = vmatpush1.msra.mxu0 %v300
  %348 = vmatprep.subr.mxu0 0.0
  %349 = vmatpush1.msra.mxu0 %v301
  %350 = vmatprep.subr.mxu0 0.0
  %351 = vmatpush1.msra.mxu0 %v302
  %352 = vmatprep.subr.mxu0 0.0
  %353 = vmatpush1.msra.mxu0 %v303
  %354 = vmatprep.subr.mxu0 0.0
  %355 = vmatpush1.msra.mxu0 %v304
  %356 = vmatprep.subr.mxu0 0.0
  %357 = vmatpush1.msra.mxu0 %v305
  %358 = vmatprep.subr.mxu0 0.0
  %359 = vmatpush1.msra.mxu0 %v306
  %360 = vmatprep.subr.mxu0 0.0
  %361 = vmatpush1.msra.mxu0 %v307
  %362 = vmatprep.subr.mxu0 0.0
  %363 = vmatpush1.msra.mxu0 %v308
  %364 = vmatprep.subr.mxu0 0.0
  %365 = vmatpush1.msra.mxu0 %v309
  %366 = vmatprep.subr.mxu0 0.0
  %367 = vmatpush1.msra.mxu0 %v310
  %368 = vmatprep.subr.mxu0 0.0
  %369 = vmatpush1.msra.mxu0 %v311
  %370 = vmatprep.subr.mxu0 0.0
  %371 = vmatpush1.msra.mxu0 %v312
  %372 = vmatprep.subr.mxu0 0.0
  %373 = vmatpush1.msra.mxu0 %v313
  %374 = vmatprep.subr.mxu0 0.0
  %375 = vmatpush1.msra.mxu0 %v314
  %376 = vmatprep.subr.mxu0 0.0
  %377 = vmatpush1.msra.mxu0 %v315
  %378 = vmatprep.subr.mxu0 0.0
  %379 = vmatpush1.msra.mxu0 %v316
  %380 = vmatprep.subr.mxu0 0.0
  %381 = vmatpush1.msra.mxu0 %v317
  %382 = vmatprep.subr.mxu0 0.0
  %383 = vmatpush1.msra.mxu0 %v318
  %384 = vmatprep.subr.mxu0 0.0
  %385 = vmatpush1.msra.mxu0 %v319
  %386 = vmatprep.subr.mxu0 0.0
  %387 = vmatpush1.msra.mxu0 %v320
  %388 = vmatprep.subr.mxu0 0.0
  %389 = vmatpush1.msra.mxu0 %v321
  %390 = vmatprep.subr.mxu0 0.0
  %391 = vmatpush1.msra.mxu0 %v322
  %392 = vmatprep.subr.mxu0 0.0
  %393 = vmatpush1.msra.mxu0 %v323
  %394 = vmatprep.subr.mxu0 0.0
  %395 = vmatpush1.msra.mxu0 %v324
  %396 = vmatprep.mubr.f32.mxu0 %v292
  %397 = vmatmul.mubr.f32.gmra.mrb[0].mxu0 %v291
  %v398 = vpop.f32.mrb[0].mxu0
  %v399 = vadd.f32 %v330, %v398
  %v400 = vpop.f32.mrb[0].mxu0
  %401 = vdwg.mxu0
  %vm402 = vcmask 523264
  %403 = vst.msk [vmem:[%s7] sm:$0xff] %vm402, %v399
  // Predicated region
  $region30: #{simple_model_forward.1} parent=0 // pred_check
    _
  $region31: #{simple_model_forward.1} parent=0 // pred_check_branch
    %405 = sbr.rel (0) target = $region33
  $region32: #{simple_model_forward.1} parent=0 // pred_region
    _
  $region33: #{simple_model_forward.1} parent=0 // pred_fallthru
    _
  // Predicated region
  $region34: #{simple_model_forward.1} parent=0 // pred_check
    _
  $region35: #{simple_model_forward.1} parent=0 // pred_check_branch
    %407 = sbr.rel (0) target = $region37
  $region36: #{simple_model_forward.1} parent=0 // pred_region
    _
  $region37: #{simple_model_forward.1} parent=0 // pred_fallthru
    _

</llo_original>
